<compile_context>
chip_gen: v7x
topology: tpu7x:2x2x1
jax: 0.10.0
libtpu: 0.0.40
codegen_flags: <defaults>
</compile_context>

<pallas_src>
import functools

import jax
import jax.numpy as jnp
import numpy as np
from jax.experimental import pallas as pl
from jax.experimental.pallas import tpu as pltpu


def _round_up(x, m):
    return ((x + m - 1) // m) * m


# ---------------------------------------------------------------------------
# Gaussian moment helpers (shared by kernel and pure-JAX reference)
# ---------------------------------------------------------------------------
def _sum(m1, v1, m2, v2):
    return m1 + m2, v1 + v2


def _inner_product(mx, vx, my, vy):
    mean = jnp.sum(mx * my, axis=-1, keepdims=True)
    # vx*vy + vx*my^2 + vy*mx^2  ==  vx*(vy + my^2) + vy*(mx^2)   (one fewer mul)
    var = jnp.sum(vx * (vy + my * my) + vy * (mx * mx), axis=-1, keepdims=True)
    return mean, var


def _mean_model(tom, tov, com, cov, tdm, tdv, cdm, cdv):
    off_m, off_v = _sum(tom, tov, com, cov)
    def_m, def_v = _sum(tdm, tdv, cdm, cdv)
    return _inner_product(off_m, off_v, def_m, def_v)


# ---------------------------------------------------------------------------
# Pallas kernel: one packed rating tile + one packed loc tile -> one fused out
# ---------------------------------------------------------------------------
def score_kernel(ratings_ref, loc_ref, out_ref):
    x = ratings_ref[...]                      # [TB, 16*D]
    D = x.shape[-1] // 16

    def col(k):                               # static lane-aligned slice (free)
        return x[:, k * D:(k + 1) * D]

    # column order matches ScoreModel.forward() argument order
    (wtom, wtov, wcom, wcov,
     ltdm, ltdv, lcdm, lcdv,
     ltom, ltov, lcom, lcov,
     wtdm, wtdv, wcdm, wcdv) = (col(k) for k in range(16))

    win_loc = loc_ref[:, 0:1]
    los_loc = loc_ref[:, 1:2]

    # win team expected score
    win_mean, win_var = _mean_model(wtom, wtov, wcom, wcov,
                                    ltdm, ltdv, lcdm, lcdv)
    win_mean = win_mean + win_loc             # home_field: Add(mean, var, loc)

    # losing team expected score
    los_mean, los_var = _mean_model(ltom, ltov, lcom, lcov,
                                    wtdm, wtdv, wcdm, wcdv)
    los_mean = los_mean + los_loc

    diff_mean = win_mean - los_mean           # Difference on Gaussian(score)
    diff_var = win_var + los_var

    # fused lane-packed output:
    #   [score_mean(win,los) | score_var(win,los) | diff_mean | diff_var]
    out_ref[...] = jnp.concatenate(
        [win_mean, los_mean, win_var, los_var, diff_mean, diff_var], axis=-1)


# ---------------------------------------------------------------------------
# Wrapper: packing, padding, grid / BlockSpecs, unpacking
# ---------------------------------------------------------------------------
def score_model(*args, tile_b=None):
    """args: 16 rating arrays [B, D] + win_loc, los_loc [B, 1]
    (exact ScoreModel.forward argument order).
    Returns (score_mean [B,2], score_var [B,2], diff_mean [B,1], diff_var [B,1])."""
    assert len(args) == 18
    B, D = args[0].shape
    f32 = jnp.float32

    # Pack 16 rating streams into one lane-dense array, and the 2 locs into one.
    ratings = jnp.concatenate([a.astype(f32) for a in args[:16]], axis=-1)   # [B, 16*D]
    locs = jnp.concatenate([args[16].astype(f32), args[17].astype(f32)],
                           axis=-1)                                          # [B, 2]

    # Batch tile: multiple of 8 sublanes, capped so double-buffered packed
    # input (2 * TB * 16*D * 4 B) stays well inside v7x's 64 MiB VMEM.
    if tile_b is None:
        tile_b = min(1024, _round_up(B, 8))
    tile_b = max(8, _round_up(tile_b, 8))

    Bp = _round_up(B, tile_b)
    if Bp != B:
        ratings = jnp.pad(ratings, ((0, Bp - B), (0, 0)))
        locs = jnp.pad(locs, ((0, Bp - B), (0, 0)))

    grid = (Bp // tile_b,)

    out = pl.pallas_call(
        score_kernel,
        out_shape=jax.ShapeDtypeStruct((Bp, 6), f32),
        grid=grid,
        in_specs=[
            pl.BlockSpec((tile_b, 16 * D), lambda i: (i, 0)),
            pl.BlockSpec((tile_b, 2), lambda i: (i, 0)),
        ],
        out_specs=pl.BlockSpec((tile_b, 6), lambda i: (i, 0)),
        compiler_params=pltpu.CompilerParams(
            # batch axis is independent -> shard across v7x's 2 TensorCores
            dimension_semantics=("parallel",),
            # headroom over v5e's 16 MiB default scoped limit, <= v7x physical
            vmem_limit_bytes=48 * 1024 * 1024,
        ),
    )(ratings, locs)

    out = out[:B]
    score_mean = out[:, 0:2]
    score_var = out[:, 2:4]
    diff_mean = out[:, 4:5]
    diff_var = out[:, 5:6]
    return score_mean, score_var, diff_mean, diff_var


# ---------------------------------------------------------------------------
# Pure-JAX reference (validates packing / tiling / padding plumbing)
# ---------------------------------------------------------------------------
def score_model_ref(*args):
    (wtom, wtov, wcom, wcov, ltdm, ltdv, lcdm, lcdv,
     ltom, ltov, lcom, lcov, wtdm, wtdv, wcdm, wcdv, wloc, lloc) = args
    wm, wv = _mean_model(wtom, wtov, wcom, wcov, ltdm, ltdv, lcdm, lcdv)
    wm = wm + wloc
    lm, lv = _mean_model(ltom, ltov, lcom, lcov, wtdm, wtdv, wcdm, wcdv)
    lm = lm + lloc
    sm = jnp.concatenate([wm, lm], axis=-1)
    sv = jnp.concatenate([wv, lv], axis=-1)
    return sm, sv, wm - lm, wv + lv


if __name__ == "__main__":
    # Small, ragged batch so the grid (3 steps with tile_b=8) and the
    # zero-padding path are both exercised.  D = 128 (lane-aligned latent dim).
    B, D = 20, 128
    key = jax.random.PRNGKey(0)
    keys = jax.random.split(key, 18)

    def mk_mean(k):
        return jax.random.normal(k, (B, D), dtype=jnp.float32)

    def mk_var(k):
        return jax.random.uniform(k, (B, D), dtype=jnp.float32,
                                  minval=0.1, maxval=1.0)

    args = []
    # 8 (mean, var) rating pairs in exact forward() argument order:
    #   win_team_off, win_conf_off, los_team_def, los_conf_def,
    #   los_team_off, los_conf_off, win_team_def, win_conf_def
    for i in range(8):
        args.append(mk_mean(keys[2 * i]))
        args.append(mk_var(keys[2 * i + 1]))
    win_loc = jax.random.normal(keys[16], (B, 1), dtype=jnp.float32)
    los_loc = jax.random.normal(keys[17], (B, 1), dtype=jnp.float32)
    args += [win_loc, los_loc]

    run = jax.jit(functools.partial(score_model, tile_b=8))
    outs = run(*args)
    outs = jax.block_until_ready(outs)

    refs = score_model_ref(*args)
    for o, r in zip(outs, refs):
        np.testing.assert_allclose(np.asarray(o), np.asarray(r),
                                   rtol=1e-5, atol=1e-5)

    print("KERNEL_OK")
</pallas_src>

<mosaic_0001>
module attributes {stable_mosaic.version = 11 : i64} {
  func.func @score_kernel(%arg0: i32, %arg1: memref<8x2048xf32, #tpu.memory_space<vmem>>, %arg2: memref<8x2xf32, #tpu.memory_space<vmem>>, %arg3: memref<8x6xf32, #tpu.memory_space<vmem>>) attributes {dimension_semantics = [#tpu.dimension_semantics<parallel>], iteration_bounds = array<i64: 3>, scalar_prefetch = 0 : i64, scratch_operands = 0 : i64, tpu.core_type = #tpu.core_type<tc>, window_params = [{transform_indices = @transform_0, window_bounds = array<i64: 8, 2048>}, {transform_indices = @transform_1, window_bounds = array<i64: 8, 2>}, {transform_indices = @transform_2, window_bounds = array<i64: 8, 6>}]} {
    %c0 = arith.constant 0 : index
    %c0_0 = arith.constant 0 : index
    %0 = vector.load %arg1[%c0, %c0_0] : memref<8x2048xf32, #tpu.memory_space<vmem>>, vector<8x2048xf32>
    %1 = vector.extract_strided_slice %0 {offsets = [0, 0], sizes = [8, 128], strides = [1, 1]} : vector<8x2048xf32> to vector<8x128xf32>
    %2 = vector.extract_strided_slice %0 {offsets = [0, 128], sizes = [8, 128], strides = [1, 1]} : vector<8x2048xf32> to vector<8x128xf32>
    %3 = vector.extract_strided_slice %0 {offsets = [0, 256], sizes = [8, 128], strides = [1, 1]} : vector<8x2048xf32> to vector<8x128xf32>
    %4 = vector.extract_strided_slice %0 {offsets = [0, 384], sizes = [8, 128], strides = [1, 1]} : vector<8x2048xf32> to vector<8x128xf32>
    %5 = vector.extract_strided_slice %0 {offsets = [0, 512], sizes = [8, 128], strides = [1, 1]} : vector<8x2048xf32> to vector<8x128xf32>
    %6 = vector.extract_strided_slice %0 {offsets = [0, 640], sizes = [8, 128], strides = [1, 1]} : vector<8x2048xf32> to vector<8x128xf32>
    %7 = vector.extract_strided_slice %0 {offsets = [0, 768], sizes = [8, 128], strides = [1, 1]} : vector<8x2048xf32> to vector<8x128xf32>
    %8 = vector.extract_strided_slice %0 {offsets = [0, 896], sizes = [8, 128], strides = [1, 1]} : vector<8x2048xf32> to vector<8x128xf32>
    %9 = vector.extract_strided_slice %0 {offsets = [0, 1024], sizes = [8, 128], strides = [1, 1]} : vector<8x2048xf32> to vector<8x128xf32>
    %10 = vector.extract_strided_slice %0 {offsets = [0, 1152], sizes = [8, 128], strides = [1, 1]} : vector<8x2048xf32> to vector<8x128xf32>
    %11 = vector.extract_strided_slice %0 {offsets = [0, 1280], sizes = [8, 128], strides = [1, 1]} : vector<8x2048xf32> to vector<8x128xf32>
    %12 = vector.extract_strided_slice %0 {offsets = [0, 1408], sizes = [8, 128], strides = [1, 1]} : vector<8x2048xf32> to vector<8x128xf32>
    %13 = vector.extract_strided_slice %0 {offsets = [0, 1536], sizes = [8, 128], strides = [1, 1]} : vector<8x2048xf32> to vector<8x128xf32>
    %14 = vector.extract_strided_slice %0 {offsets = [0, 1664], sizes = [8, 128], strides = [1, 1]} : vector<8x2048xf32> to vector<8x128xf32>
    %15 = vector.extract_strided_slice %0 {offsets = [0, 1792], sizes = [8, 128], strides = [1, 1]} : vector<8x2048xf32> to vector<8x128xf32>
    %16 = vector.extract_strided_slice %0 {offsets = [0, 1920], sizes = [8, 128], strides = [1, 1]} : vector<8x2048xf32> to vector<8x128xf32>
    %c0_1 = arith.constant 0 : index
    %c0_2 = arith.constant 0 : index
    %17 = vector.load %arg2[%c0_1, %c0_2] : memref<8x2xf32, #tpu.memory_space<vmem>>, vector<8x1xf32>
    %c0_3 = arith.constant 0 : index
    %c1 = arith.constant 1 : index
    %18 = vector.load %arg2[%c0_3, %c1] : memref<8x2xf32, #tpu.memory_space<vmem>>, vector<8x1xf32>
    %19 = arith.addf %1, %3 : vector<8x128xf32>
    %20 = arith.addf %2, %4 : vector<8x128xf32>
    %21 = arith.addf %5, %7 : vector<8x128xf32>
    %22 = arith.addf %6, %8 : vector<8x128xf32>
    %23 = arith.mulf %19, %21 : vector<8x128xf32>
    %cst = arith.constant dense<0.000000e+00> : vector<8xf32>
    %24 = vector.multi_reduction <add>, %23, %cst [1] : vector<8x128xf32> to vector<8xf32>
    %25 = vector.shape_cast %24 : vector<8xf32> to vector<8x1xf32>
    %26 = arith.mulf %21, %21 : vector<8x128xf32>
    %27 = arith.addf %22, %26 : vector<8x128xf32>
    %28 = arith.mulf %20, %27 : vector<8x128xf32>
    %29 = arith.mulf %19, %19 : vector<8x128xf32>
    %30 = arith.mulf %22, %29 : vector<8x128xf32>
    %31 = arith.addf %28, %30 : vector<8x128xf32>
    %cst_4 = arith.constant dense<0.000000e+00> : vector<8xf32>
    %32 = vector.multi_reduction <add>, %31, %cst_4 [1] : vector<8x128xf32> to vector<8xf32>
    %33 = vector.shape_cast %32 : vector<8xf32> to vector<8x1xf32>
    %34 = arith.addf %25, %17 : vector<8x1xf32>
    %35 = arith.addf %9, %11 : vector<8x128xf32>
    %36 = arith.addf %10, %12 : vector<8x128xf32>
    %37 = arith.addf %13, %15 : vector<8x128xf32>
    %38 = arith.addf %14, %16 : vector<8x128xf32>
    %39 = arith.mulf %35, %37 : vector<8x128xf32>
    %cst_5 = arith.constant dense<0.000000e+00> : vector<8xf32>
    %40 = vector.multi_reduction <add>, %39, %cst_5 [1] : vector<8x128xf32> to vector<8xf32>
    %41 = vector.shape_cast %40 : vector<8xf32> to vector<8x1xf32>
    %42 = arith.mulf %37, %37 : vector<8x128xf32>
    %43 = arith.addf %38, %42 : vector<8x128xf32>
    %44 = arith.mulf %36, %43 : vector<8x128xf32>
    %45 = arith.mulf %35, %35 : vector<8x128xf32>
    %46 = arith.mulf %38, %45 : vector<8x128xf32>
    %47 = arith.addf %44, %46 : vector<8x128xf32>
    %cst_6 = arith.constant dense<0.000000e+00> : vector<8xf32>
    %48 = vector.multi_reduction <add>, %47, %cst_6 [1] : vector<8x128xf32> to vector<8xf32>
    %49 = vector.shape_cast %48 : vector<8xf32> to vector<8x1xf32>
    %50 = arith.addf %41, %18 : vector<8x1xf32>
    %51 = arith.subf %34, %50 : vector<8x1xf32>
    %52 = arith.addf %33, %49 : vector<8x1xf32>
    %53 = tpu.concatenate %34, %50, %33, %49, %51, %52 in 1 : vector<8x1xf32>, vector<8x1xf32>, vector<8x1xf32>, vector<8x1xf32>, vector<8x1xf32>, vector<8x1xf32> -> vector<8x6xf32>
    %c0_7 = arith.constant 0 : index
    %c0_8 = arith.constant 0 : index
    %54 = vector.load %arg3[%c0_7, %c0_8] : memref<8x6xf32, #tpu.memory_space<vmem>>, vector<8x6xf32>
    tpu.vector_store %arg3[%c0_7, %c0_8], %53 {strides = array<i32>} : memref<8x6xf32, #tpu.memory_space<vmem>>, vector<8x6xf32>,
    return
  }
  func.func @transform_0(%arg0: i32) -> (i32, i32) {
    %c0_i32 = arith.constant 0 : i32
    %c0_i32_0 = arith.constant 0 : i32
    return %arg0, %c0_i32 : i32, i32
  }
  func.func @transform_1(%arg0: i32) -> (i32, i32) {
    %c0_i32 = arith.constant 0 : i32
    %c0_i32_0 = arith.constant 0 : i32
    return %arg0, %c0_i32 : i32, i32
  }
  func.func @transform_2(%arg0: i32) -> (i32, i32) {
    %c0_i32 = arith.constant 0 : i32
    %c0_i32_0 = arith.constant 0 : i32
    return %arg0, %c0_i32 : i32, i32
  }
}

</mosaic_0001>

<llo_original>
// kernel: score_model.1
$region0: #{score_model.1}
  #allocation0 [shape = 'u32[]', space=smem, size = 0x4, offset = 0x4, fixed_abs, tag = 'smem constant byte address 0x4 - core index']
  #allocation1 [shape = 'u32[144,128]{1,0:T(1,128)}', space=vmem, size = 0x12000, scoped, tag = 'internal scratch']
  %s0 = inlined_call_operand.vmem [shape: f32[24,2048], index: 0, kind: input, shape index: {}]
  %s1 = inlined_call_operand.vmem [shape: f32[24,2], index: 1, kind: input, shape index: {}]
  %s2 = inlined_call_operand.vmem [shape: f32[24,6], index: 2, kind: output, shape index: {}]
  %s3 = sld [smem:[#allocation0]]
  $region41: #{score_model.1} parent=0
    _
  %s5 = ssub.s32 1, %s3
  %s6 = scalar_select 0, %s5, %s3
  loop: start=0, step=1, limit=5
  $region2: #{score_model.1} parent=0 // loop_pre_header
    _
  $region3: #{score_model.1} parent=0 // loop_header
    %s8 = sphi 0, %s12
    %p9 = scmp.ge.s32.totalorder %s8, 5
    %s18 = sphi 0, %s20
    %s21 = sphi 0, %s18
    %s22 = sphi 0, %s21
    %s38 = sphi 0, %s22
    %s44 = sphi 0, %s46
    %s47 = sphi 0, %s44
    %s48 = sphi 0, %s47
    %s64 = sphi 0, %s48
    %s70 = sphi 0, %s72
    %s73 = sphi 0, %s70
    %s74 = sphi 0, %s73
    %s90 = sphi 0, %s74
  $region4: #{score_model.1} parent=0 // loop_header_branch
    %11 = sbr.rel (%p9) target = $region8
  $region5: #{score_model.1} parent=0 // loop_body
    %s13 = ssub.s32 %s8, 1
    %s14 = ssub.s32 %s8, 2
    %s15 = sadd.s32 %s8, 1
    %s16 = ssub.s32 %s8, %s15
    %p17 = scmp.eq.s32.totalorder %s16, 0
    %s19 = sadd.s32 %s18, 1
    %s20 = scalar_select %p17, %s18, %s19
    %p23 = pneg %p17
    %p24 = scmp.eq.s32.totalorder %s8, 2
    %p25 = por %p23, %p24
    %p26 = scmp.ne.s32.totalorder %s18, %s21
    %p27 = scmp.eq.s32.totalorder %s8, 0
    %p28 = por %p26, %p27
    %p29 = scmp.ne.s32.totalorder %s18, %s21
    %p30 = scmp.eq.s32.totalorder %s13, 2
    %p31 = por %p29, %p30
    %p32 = scmp.ne.s32.totalorder %s21, %s22
    %p33 = scmp.eq.s32.totalorder %s13, 0
    %p34 = por %p32, %p33
    %p35 = scmp.ne.s32.totalorder %s21, %s22
    %p36 = scmp.eq.s32.totalorder %s14, 2
    %p37 = por %p35, %p36
    %p39 = scmp.ne.s32.totalorder %s22, %s38
    %p40 = scmp.eq.s32.totalorder %s14, 0
    %p41 = por %p39, %p40
    %s42 = ssub.s32 %s8, %s15
    %p43 = scmp.eq.s32.totalorder %s42, 0
    %s45 = sadd.s32 %s44, 1
    %s46 = scalar_select %p43, %s44, %s45
    %p49 = pneg %p43
    %p50 = scmp.eq.s32.totalorder %s8, 2
    %p51 = por %p49, %p50
    %p52 = scmp.ne.s32.totalorder %s44, %s47
    %p53 = scmp.eq.s32.totalorder %s8, 0
    %p54 = por %p52, %p53
    %p55 = scmp.ne.s32.totalorder %s44, %s47
    %p56 = scmp.eq.s32.totalorder %s13, 2
    %p57 = por %p55, %p56
    %p58 = scmp.ne.s32.totalorder %s47, %s48
    %p59 = scmp.eq.s32.totalorder %s13, 0
    %p60 = por %p58, %p59
    %p61 = scmp.ne.s32.totalorder %s47, %s48
    %p62 = scmp.eq.s32.totalorder %s14, 2
    %p63 = por %p61, %p62
    %p65 = scmp.ne.s32.totalorder %s48, %s64
    %p66 = scmp.eq.s32.totalorder %s14, 0
    %p67 = por %p65, %p66
    %s68 = ssub.s32 %s8, %s15
    %p69 = scmp.eq.s32.totalorder %s68, 0
    %s71 = sadd.s32 %s70, 1
    %s72 = scalar_select %p69, %s70, %s71
    %p75 = pneg %p69
    %p76 = scmp.eq.s32.totalorder %s8, 2
    %p77 = por %p75, %p76
    %p78 = scmp.ne.s32.totalorder %s70, %s73
    %p79 = scmp.eq.s32.totalorder %s8, 0
    %p80 = por %p78, %p79
    %p81 = scmp.ne.s32.totalorder %s70, %s73
    %p82 = scmp.eq.s32.totalorder %s13, 2
    %p83 = por %p81, %p82
    %p84 = scmp.ne.s32.totalorder %s73, %s74
    %p85 = scmp.eq.s32.totalorder %s13, 0
    %p86 = por %p84, %p85
    %p87 = scmp.ne.s32.totalorder %s73, %s74
    %p88 = scmp.eq.s32.totalorder %s14, 2
    %p89 = por %p87, %p88
    %p91 = scmp.ne.s32.totalorder %s74, %s90
    %p92 = scmp.eq.s32.totalorder %s14, 0
    %p93 = por %p91, %p92
    %p94 = scmp.le.s32.totalorder 1, %s8
    %p95 = scmp.lt.s32.totalorder %s8, 4
    %p96 = pnand %p94, %p95
    %p97 = pneg %p96
    // Predicated region
    $region9: #{score_model.1} parent=5 // pred_check
      _
    $region10: #{score_model.1} parent=5 // pred_check_branch
      %99 = sbr.rel (%p96) target = $region12
    $region11: #{score_model.1} parent=5 // pred_region
      %s100 = ssub.s32 %s8, 1
    $region12: #{score_model.1} parent=5 // pred_fallthru
      _
    %p101 = scmp.lt.s32.totalorder %s8, 3
    // Predicated region
    $region13: #{score_model.1} parent=5 // pred_check
      %p102 = pneg %p101
    $region14: #{score_model.1} parent=5 // pred_check_branch
      %104 = sbr.rel (%p102) target = $region16
    $region15: #{score_model.1} parent=5 // pred_region
      // Predicated region
      $region17: #{score_model.1} parent=15 // pred_check
        %p105 = pneg %p28
      $region18: #{score_model.1} parent=15 // pred_check_branch
        %107 = sbr.rel (%p105) target = $region20
      $region19: #{score_model.1} parent=15 // pred_region
        %p108 = scmp.lt.s32.totalorder %s8, 2
        %s109 = scalar_select %p108, %s8, 2
        %s110 = smul.addr %s109, 16
        %s111 = smul.addr %s110, 8
        %s112 = scalar_lea.vmem %s0, %s111
      $region20: #{score_model.1} parent=15 // pred_fallthru
        _
      // Predicated region
      $region21: #{score_model.1} parent=15 // pred_check
        %p113 = pneg %p54
      $region22: #{score_model.1} parent=15 // pred_check_branch
        %115 = sbr.rel (%p113) target = $region24
      $region23: #{score_model.1} parent=15 // pred_region
        %p116 = scmp.lt.s32.totalorder %s8, 2
        %s117 = scalar_select %p116, %s8, 2
        %s118 = smul.addr %s117, 8
        %s119 = scalar_lea.vmem %s1, %s118
      $region24: #{score_model.1} parent=15 // pred_fallthru
        _
    $region16: #{score_model.1} parent=5 // pred_fallthru
      _
    %p120 = scmp.le.s32.totalorder 1, %s8
    %p121 = scmp.lt.s32.totalorder %s8, 4
    %p122 = pnand %p120, %p121
    %p123 = pneg %p122
    // Predicated region
    $region25: #{score_model.1} parent=5 // pred_check
      _
    $region26: #{score_model.1} parent=5 // pred_check_branch
      %125 = sbr.rel (%p122) target = $region28
    $region27: #{score_model.1} parent=5 // pred_region
      %s126 = ssub.s32 %s8, 1
      %p127 = scmp.lt.s32.totalorder %s13, 2
      %s128 = scalar_select %p127, %s13, 2
      %s129 = smul.addr %s128, 16
      %s130 = smul.addr %s129, 8
      %s131 = scalar_lea.vmem %s0, %s130
      %p132 = pneg %p34
      %p133 = pneg %p31
      %p134 = scmp.lt.s32.totalorder %s13, 2
      %s135 = scalar_select %p134, %s13, 2
      %s136 = smul.addr %s135, 8
      %s137 = scalar_lea.vmem %s1, %s136
      %p138 = pneg %p60
      %p139 = pneg %p57
      %p140 = pneg %p86
      %p141 = pneg %p83
      %p142 = scmp.lt.s32.totalorder %s13, 2
      %s143 = scalar_select %p142, %s13, 2
      %s144 = smul.addr %s143, 8
      %s145 = scalar_lea.vmem %s2, %s144
      %p146 = scmp.lt.s32.totalorder %s13, 2
      %s147 = scalar_select %p146, %s13, 2
      %s148 = smul.addr %s147, 16
      %s149 = smul.addr %s148, 8
      %s150 = scalar_lea.vmem %s0, %s149
      %p151 = scmp.lt.s32.totalorder %s13, 2
      %s152 = scalar_select %p151, %s13, 2
      %s153 = smul.addr %s152, 8
      %s154 = scalar_lea.vmem %s1, %s153
      %p155 = scmp.lt.s32.totalorder %s13, 2
      %s156 = scalar_select %p155, %s13, 2
      %s157 = smul.addr %s156, 8
      %s158 = scalar_lea.vmem %s2, %s157
      %v159 = vld [vmem:[%s150] sm:$0xff]
      %v160 = vld [vmem:[%s150 + $0x8] sm:$0xff]
      %v161 = vld [vmem:[%s150 + $0x10] sm:$0xff]
      %v162 = vld [vmem:[%s150 + $0x18] sm:$0xff]
      %v163 = vld [vmem:[%s150 + $0x20] sm:$0xff]
      %v164 = vld [vmem:[%s150 + $0x28] sm:$0xff]
      %v165 = vld [vmem:[%s150 + $0x30] sm:$0xff]
      %v166 = vld [vmem:[%s150 + $0x38] sm:$0xff]
      %v167 = vld [vmem:[%s150 + $0x40] sm:$0xff]
      %v168 = vld [vmem:[%s150 + $0x48] sm:$0xff]
      %v169 = vld [vmem:[%s150 + $0x50] sm:$0xff]
      %v170 = vld [vmem:[%s150 + $0x58] sm:$0xff]
      %v171 = vld [vmem:[%s150 + $0x60] sm:$0xff]
      %v172 = vld [vmem:[%s150 + $0x68] sm:$0xff]
      %v173 = vld [vmem:[%s150 + $0x70] sm:$0xff]
      %v174 = vld [vmem:[%s150 + $0x78] sm:$0xff]
      %v175 = vld [vmem:[%s154] sm:$0xff]
      %v176 = vadd.f32 %v159, %v161
      %v177 = vadd.f32 %v160, %v162
      %v178 = vadd.f32 %v163, %v165
      %v179 = vadd.f32 %v164, %v166
      %v180 = vmul.f32 %v176, %v178
      %181 = vadd.xlane.f32.xlu0 %v180
      %v182 = vpop.xlane.xlu0 %181
      %v183 = vmul.f32 %v178, %v178
      %v184 = vadd.f32 %v179, %v183
      %v185 = vmul.f32 %v177, %v184
      %v186 = vmul.f32 %v176, %v176
      %v187 = vmul.f32 %v179, %v186
      %v188 = vadd.f32 %v185, %v187
      %189 = vadd.xlane.f32.xlu0 %v188
      %v190 = vpop.xlane.xlu0 %189
      %v191 = vadd.f32 %v182, %v175
      %v192 = vadd.f32 %v167, %v169
      %v193 = vadd.f32 %v168, %v170
      %v194 = vadd.f32 %v171, %v173
      %v195 = vadd.f32 %v172, %v174
      %v196 = vmul.f32 %v192, %v194
      %197 = vadd.xlane.f32.xlu0 %v196
      %v198 = vpop.xlane.xlu0 %197
      %v199 = vmul.f32 %v194, %v194
      %v200 = vadd.f32 %v195, %v199
      %v201 = vmul.f32 %v193, %v200
      %v202 = vmul.f32 %v192, %v192
      %v203 = vmul.f32 %v195, %v202
      %v204 = vadd.f32 %v201, %v203
      %205 = vadd.xlane.f32.xlu0 %v204
      %v206 = vpop.xlane.xlu0 %205
      %v207 = vadd.f32 %v198, %v175
      %209 = vrot.lane.b32.xlu0 %v207, 127
      %v210 = vpop.permute.xlu0 %209
      %v212 = vsub.f32 %v191, %v210
      %v213 = vadd.f32 %v190, %v206
      %215 = vrot.lane.b32.xlu0 %v212, 4
      %v216 = vpop.permute.xlu0 %215
      %vm218 = vcmask 7168
      %v219 = vsel %vm218, %v191, %v207
      %vm220 = vcmask 15360
      %v221 = vsel %vm220, %v219, %v190
      %vm222 = vcmask 23552
      %v223 = vsel %vm222, %v221, %v206
      %vm224 = vcmask 31744
      %v225 = vsel %vm224, %v223, %v216
      %vm226 = vcmask 39936
      %v227 = vsel %vm226, %v225, %v213
      %vm228 = vcmask 48128
      %229 = vst.msk [vmem:[%s158] sm:$0xff] %vm228, %v227
      %p230 = scmp.lt.s32.totalorder %s13, 2
      %s231 = scalar_select %p230, %s13, 2
      %s232 = smul.addr %s231, 8
      %s233 = scalar_lea.vmem %s2, %s232
      // Predicated region
      $region29: #{score_model.1} parent=27 // pred_check
        %p234 = pneg %p83
      $region30: #{score_model.1} parent=27 // pred_check_branch
        %236 = sbr.rel (%p234) target = $region32
      $region31: #{score_model.1} parent=27 // pred_region
        _
      $region32: #{score_model.1} parent=27 // pred_fallthru
        _
    $region28: #{score_model.1} parent=5 // pred_fallthru
      _
    %p237 = scmp.le.s32.totalorder 2, %s8
    // Predicated region
    $region33: #{score_model.1} parent=5 // pred_check
      %p238 = pneg %p237
    $region34: #{score_model.1} parent=5 // pred_check_branch
      %240 = sbr.rel (%p238) target = $region36
    $region35: #{score_model.1} parent=5 // pred_region
      %s241 = ssub.s32 %s8, 2
      // Predicated region
      $region37: #{score_model.1} parent=35 // pred_check
        %p242 = pneg %p89
      $region38: #{score_model.1} parent=35 // pred_check_branch
        %244 = sbr.rel (%p242) target = $region40
      $region39: #{score_model.1} parent=35 // pred_region
        %p245 = scmp.lt.s32.totalorder %s14, 2
        %s246 = scalar_select %p245, %s14, 2
        %s247 = smul.addr %s246, 8
        %s248 = scalar_lea.vmem %s2, %s247
      $region40: #{score_model.1} parent=35 // pred_fallthru
        _
    $region36: #{score_model.1} parent=5 // pred_fallthru
      _
  $region6: #{score_model.1} parent=0 // loop_footer
    %s12 = sadd.s32 1, %s8
  $region7: #{score_model.1} parent=0 // loop_footer_branch
    %7 = sbr.rel target = $region3
  $region8: #{score_model.1} parent=0 // loop_exit
    _

</llo_original>
